<compile_context>
chip_gen: v5e
topology: v5e:2x2
jax: 0.10.0
libtpu: 0.0.40
codegen_flags: <defaults>
</compile_context>

<pallas_src>
import functools

import jax
import jax.numpy as jnp
import numpy as np
from jax import lax
from jax.experimental import pallas as pl
from jax.experimental.pallas import tpu as pltpu

# ---------------- synthetic "dataset" geometry ----------------
L_XC = 16
L_YC = 16
L_W = 16
L_H = 16
N_CLS = 8
OBJ_IDX = L_XC + L_YC + L_W + L_H          # 64
CLS_START = OBJ_IDX + 1                     # 65
V_TOTAL = CLS_START + N_CLS                 # 73

XC_SL = (0, L_XC)
YC_SL = (L_XC, L_XC + L_YC)
W_SL = (L_XC + L_YC, L_XC + L_YC + L_W)
H_SL = (L_XC + L_YC + L_W, OBJ_IDX)
CLS_SL = (CLS_START, V_TOTAL)


def _bce_elem(p, t):
    """Elementwise PyTorch-style BCE: -(t*log(p) + (1-t)*log(1-p)), log clamped at -100."""
    # TODO(synk): a BCE-with-logits variant (one exp/element) would halve EUP work,
    # but the module's interface is sigmoid probabilities, so keep the two-log form.
    log_p = jnp.maximum(jnp.log(p), -100.0)
    log_1mp = jnp.maximum(jnp.log(1.0 - p), -100.0)
    return -(t * log_p + (1.0 - t) * log_1mp)


def _experimental_loss_kernel(pred_ref, tgt_ref, out_ref):
    # pred_ref / tgt_ref : (TB, N, V) f32 VMEM blocks (TB samples per grid step)
    # out_ref            : (TB, 128) — lanes 0..5 = [xc, yc, w, h, obj, cls]
    p = pred_ref[...]
    t = tgt_ref[...]
    tb, n_rows, _ = p.shape

    bce = _bce_elem(p, t)                                        # (TB, N, V)

    # --- per-sample row condition from target objectness (single compare) ---
    t_obj = t[:, :, OBJ_IDX:OBJ_IDX + 1]                         # (TB, N, 1)
    pos_count = jnp.sum((t_obj > 0.0).astype(jnp.float32),
                        axis=1, keepdims=True)                   # (TB, 1, 1)
    target_val = jnp.where(pos_count > 0.0, 1.0, 0.0)            # (TB, 1, 1)
    cond_f = (t_obj == target_val).astype(jnp.float32)           # (TB, N, 1)
    k = jnp.sum(cond_f[:, :, 0], axis=1, keepdims=True)          # (TB, 1) selected rows
    # NOTE: k == 0 (positives present but none exactly 1.0) yields NaN, which
    # matches the PyTorch reference (mean over an empty selection).

    # --- one masked reduction pass over rows, then cheap lane slice-sums ---
    masked_cols = jnp.sum(bce * cond_f, axis=1)                  # (TB, V)
    obj_sum = jnp.sum(bce[:, :, OBJ_IDX:OBJ_IDX + 1], axis=1)    # (TB, 1) unmasked

    def comp(sl):
        lo, hi = sl
        s = jnp.sum(masked_cols[:, lo:hi], axis=1, keepdims=True)  # (TB, 1)
        return s / (k * float(hi - lo))

    l_xc = comp(XC_SL)
    l_yc = comp(YC_SL)
    l_w = comp(W_SL)
    l_h = comp(H_SL)
    l_cls = comp(CLS_SL)
    l_obj = obj_sum / float(n_rows)

    # Lane-dense (TB, 128) output: lanes 0..5 carry the per-sample losses.
    col = lax.broadcasted_iota(jnp.int32, (tb, 128), 1)
    vals = (jnp.where(col == 0, l_xc, 0.0)
            + jnp.where(col == 1, l_yc, 0.0)
            + jnp.where(col == 2, l_w, 0.0)
            + jnp.where(col == 3, l_h, 0.0)
            + jnp.where(col == 4, l_obj, 0.0)
            + jnp.where(col == 5, l_cls, 0.0))
    out_ref[...] = vals


def _choose_tile_batch(B, N, V):
    """Pick samples-per-grid-step against a VMEM budget valid on v5e/v6e/v7x."""
    # Resident bytes per sample per step:
    #   2 inputs x 2 pipeline buffers x f32  +  ~2x f32 of bce/cond temporaries.
    per_sample_resident = N * V * 4 * 6
    per_sample_io = N * V * 4 * 2
    budget = 24 << 20                        # fits default scoped VMEM everywhere
    tb = max(1, budget // per_sample_resident)
    if tb >= B:
        # Whole batch fits in one step.  Only split (for v7x's 2 TensorCores)
        # when there is enough work to amortize extra grid steps.
        if B >= 16 and B * per_sample_io >= (4 << 20):
            return max(8, ((B // 2) // 8) * 8)
        return B
    # Sublane-aligned so the (TB, 128) output block satisfies the (8, 128) rule.
    return max(8, (min(tb, B) // 8) * 8)


@functools.partial(jax.jit, static_argnames=())
def experimental_loss(predictions, targets):
    """predictions/targets: (B, N, V) float32.  Returns (total_loss, per_component (6,))."""
    B, N, V = predictions.shape
    assert V == V_TOTAL

    if predictions.dtype != jnp.float32:
        predictions = predictions.astype(jnp.float32)
    if targets.dtype != jnp.float32:
        targets = targets.astype(jnp.float32)

    tb = _choose_tile_batch(B, N, V)
    b_pad = ((B + tb - 1) // tb) * tb
    if b_pad != B:
        pad = ((0, b_pad - B), (0, 0), (0, 0))
        # Neutral padding: pred=0.5 (finite logs); target objectness=0 selects
        # the "== 0" branch with k = N (no NaNs).  Padded rows are dropped
        # before the batch average below.
        predictions = jnp.pad(predictions, pad, constant_values=0.5)
        targets = jnp.pad(targets, pad, constant_values=0.0)

    out = pl.pallas_call(
        _experimental_loss_kernel,
        out_shape=jax.ShapeDtypeStruct((b_pad, 128), jnp.float32),
        grid_spec=pltpu.PrefetchScalarGridSpec(
            num_scalar_prefetch=0,
            grid=(b_pad // tb,),
            in_specs=[
                pl.BlockSpec((tb, N, V), lambda b: (b, 0, 0)),
                pl.BlockSpec((tb, N, V), lambda b: (b, 0, 0)),
            ],
            out_specs=pl.BlockSpec((tb, 128), lambda b: (b, 0)),
        ),
        compiler_params=pltpu.CompilerParams(
            dimension_semantics=("parallel",),
            vmem_limit_bytes=32 * 1024 * 1024,
        ),
    )(predictions, targets)

    per_sample = out[:B, :6]                       # (B, 6): xc, yc, w, h, obj, cls
    per_component = jnp.mean(per_sample, axis=0)   # average over batch (== /batch_size)
    total = jnp.sum(per_component)                 # sum of the loss dict values
    return total, per_component


# ---------------- pure-numpy reference (mirrors the PyTorch module) ----------------
def _ref_loss(pred, tgt):
    pred = np.asarray(pred, dtype=np.float64)
    tgt = np.asarray(tgt, dtype=np.float64)
    B = pred.shape[0]

    def bce_mean(p, t):
        lp = np.maximum(np.log(p), -100.0)
        l1p = np.maximum(np.log(1.0 - p), -100.0)
        return float(np.mean(-(t * lp + (1.0 - t) * l1p)))

    acc = np.zeros(6)
    for i in range(B):
        p, t = pred[i], tgt[i]
        t_obj = t[:, OBJ_IDX]
        if (t_obj > 0).sum() > 0:
            cond = t_obj == 1.0
        else:
            cond = t_obj == 0.0
        for j, (lo, hi) in enumerate([XC_SL, YC_SL, W_SL, H_SL]):
            acc[j] += bce_mean(p[cond, lo:hi], t[cond, lo:hi])
        acc[4] += bce_mean(p[:, OBJ_IDX], t[:, OBJ_IDX])
        acc[5] += bce_mean(p[cond, CLS_SL[0]:CLS_SL[1]], t[cond, CLS_SL[0]:CLS_SL[1]])
    acc /= B
    return acc.sum(), acc


if __name__ == "__main__":
    key = jax.random.PRNGKey(0)
    B, N = 2, 32

    k1, k2, k3 = jax.random.split(key, 3)
    # predictions: sigmoid outputs in (0, 1)
    predictions = jax.nn.sigmoid(jax.random.normal(k1, (B, N, V_TOTAL), jnp.float32))

    # targets: ordinals / class targets uniform in [0,1]; objectness strictly 0/1.
    targets = jax.random.uniform(k2, (B, N, V_TOTAL), jnp.float32)
    obj_tgt = (jax.random.uniform(k3, (B, N)) > 0.7).astype(jnp.float32)
    obj_tgt = obj_tgt.at[1].set(0.0)   # sample 1 has no positives -> exercises the else branch
    targets = targets.at[:, :, OBJ_IDX].set(obj_tgt)

    total, per_comp = experimental_loss(predictions, targets)
    total = jax.block_until_ready(total)
    per_comp = jax.block_until_ready(per_comp)

    ref_total, ref_comp = _ref_loss(predictions, targets)
    np.testing.assert_allclose(np.asarray(per_comp), ref_comp, rtol=1e-5, atol=1e-5)
    np.testing.assert_allclose(float(total), ref_total, rtol=1e-5, atol=1e-5)

    print("KERNEL_OK")
</pallas_src>

<mosaic_0001>
module attributes {stable_mosaic.version = 11 : i64} {
  func.func @_experimental_loss_kernel(%arg0: i32, %arg1: memref<2x32x73xf32, #tpu.memory_space<vmem>>, %arg2: memref<2x32x73xf32, #tpu.memory_space<vmem>>, %arg3: memref<2x128xf32, #tpu.memory_space<vmem>>) attributes {dimension_semantics = [#tpu.dimension_semantics<parallel>], iteration_bounds = array<i64: 1>, scalar_prefetch = 0 : i64, scratch_operands = 0 : i64, tpu.core_type = #tpu.core_type<tc>, window_params = [{transform_indices = @transform_0, window_bounds = array<i64: 2, 32, 73>}, {transform_indices = @transform_1, window_bounds = array<i64: 2, 32, 73>}, {transform_indices = @transform_2, window_bounds = array<i64: 2, 128>}]} {
    %c0 = arith.constant 0 : index
    %c0_0 = arith.constant 0 : index
    %c0_1 = arith.constant 0 : index
    %0 = vector.load %arg1[%c0, %c0_0, %c0_1] : memref<2x32x73xf32, #tpu.memory_space<vmem>>, vector<2x32x73xf32>
    %c0_2 = arith.constant 0 : index
    %c0_3 = arith.constant 0 : index
    %c0_4 = arith.constant 0 : index
    %1 = vector.load %arg2[%c0_2, %c0_3, %c0_4] : memref<2x32x73xf32, #tpu.memory_space<vmem>>, vector<2x32x73xf32>
    %2 = math.log %0 : vector<2x32x73xf32>
    %cst = arith.constant -1.000000e+02 : f32
    %3 = vector.broadcast %cst : f32 to vector<2x32x73xf32>
    %4 = arith.maximumf %2, %3 : vector<2x32x73xf32>
    %cst_5 = arith.constant 1.000000e+00 : f32
    %5 = vector.broadcast %cst_5 : f32 to vector<2x32x73xf32>
    %6 = arith.subf %5, %0 : vector<2x32x73xf32>
    %7 = math.log %6 : vector<2x32x73xf32>
    %cst_6 = arith.constant -1.000000e+02 : f32
    %8 = vector.broadcast %cst_6 : f32 to vector<2x32x73xf32>
    %9 = arith.maximumf %7, %8 : vector<2x32x73xf32>
    %10 = arith.mulf %1, %4 : vector<2x32x73xf32>
    %cst_7 = arith.constant 1.000000e+00 : f32
    %11 = vector.broadcast %cst_7 : f32 to vector<2x32x73xf32>
    %12 = arith.subf %11, %1 : vector<2x32x73xf32>
    %13 = arith.mulf %12, %9 : vector<2x32x73xf32>
    %14 = arith.addf %10, %13 : vector<2x32x73xf32>
    %cst_8 = arith.constant 0.000000e+00 : f32
    %15 = vector.broadcast %cst_8 : f32 to vector<2x32x73xf32>
    %16 = arith.subf %15, %14 : vector<2x32x73xf32>
    %17 = vector.extract_strided_slice %1 {offsets = [0, 0, 64], sizes = [2, 32, 1], strides = [1, 1, 1]} : vector<2x32x73xf32> to vector<2x32x1xf32>
    %cst_9 = arith.constant 0.000000e+00 : f32
    %18 = vector.broadcast %cst_9 : f32 to vector<2x32x1xf32>
    %19 = arith.cmpf ogt, %17, %18 : vector<2x32x1xf32>
    %20 = arith.extui %19 : vector<2x32x1xi1> to vector<2x32x1xi32>
    %21 = arith.sitofp %20 : vector<2x32x1xi32> to vector<2x32x1xf32>
    %cst_10 = arith.constant dense<0.000000e+00> : vector<2x1xf32>
    %22 = vector.multi_reduction <add>, %21, %cst_10 [1] : vector<2x32x1xf32> to vector<2x1xf32>
    %23 = vector.shape_cast %22 : vector<2x1xf32> to vector<2x1x1xf32>
    %cst_11 = arith.constant 0.000000e+00 : f32
    %24 = vector.broadcast %cst_11 : f32 to vector<2x1x1xf32>
    %25 = arith.cmpf ogt, %23, %24 : vector<2x1x1xf32>
    %cst_12 = arith.constant 1.000000e+00 : f32
    %cst_13 = arith.constant 0.000000e+00 : f32
    %26 = vector.broadcast %cst_12 : f32 to vector<2x1x1xf32>
    %27 = vector.broadcast %cst_13 : f32 to vector<2x1x1xf32>
    %28 = arith.select %25, %26, %27 : vector<2x1x1xi1>, vector<2x1x1xf32>
    %29 = vector.broadcast %28 : vector<2x1x1xf32> to vector<2x32x1xf32>
    %30 = arith.cmpf oeq, %17, %29 : vector<2x32x1xf32>
    %31 = arith.extui %30 : vector<2x32x1xi1> to vector<2x32x1xi32>
    %32 = arith.sitofp %31 : vector<2x32x1xi32> to vector<2x32x1xf32>
    %33 = vector.shape_cast %32 : vector<2x32x1xf32> to vector<2x32xf32>
    %cst_14 = arith.constant dense<0.000000e+00> : vector<2xf32>
    %34 = vector.multi_reduction <add>, %33, %cst_14 [1] : vector<2x32xf32> to vector<2xf32>
    %35 = vector.shape_cast %34 : vector<2xf32> to vector<2x1xf32>
    %36 = vector.broadcast %32 : vector<2x32x1xf32> to vector<2x32x73xf32>
    %37 = arith.mulf %16, %36 : vector<2x32x73xf32>
    %cst_15 = arith.constant dense<0.000000e+00> : vector<2x73xf32>
    %38 = vector.multi_reduction <add>, %37, %cst_15 [1] : vector<2x32x73xf32> to vector<2x73xf32>
    %39 = vector.extract_strided_slice %16 {offsets = [0, 0, 64], sizes = [2, 32, 1], strides = [1, 1, 1]} : vector<2x32x73xf32> to vector<2x32x1xf32>
    %cst_16 = arith.constant dense<0.000000e+00> : vector<2x1xf32>
    %40 = vector.multi_reduction <add>, %39, %cst_16 [1] : vector<2x32x1xf32> to vector<2x1xf32>
    %41 = vector.extract_strided_slice %38 {offsets = [0, 0], sizes = [2, 16], strides = [1, 1]} : vector<2x73xf32> to vector<2x16xf32>
    %cst_17 = arith.constant dense<0.000000e+00> : vector<2xf32>
    %42 = vector.multi_reduction <add>, %41, %cst_17 [1] : vector<2x16xf32> to vector<2xf32>
    %43 = vector.shape_cast %42 : vector<2xf32> to vector<2x1xf32>
    %cst_18 = arith.constant 1.600000e+01 : f32
    %44 = vector.broadcast %cst_18 : f32 to vector<2x1xf32>
    %45 = arith.mulf %35, %44 : vector<2x1xf32>
    %46 = arith.divf %43, %45 : vector<2x1xf32>
    %47 = vector.extract_strided_slice %38 {offsets = [0, 16], sizes = [2, 16], strides = [1, 1]} : vector<2x73xf32> to vector<2x16xf32>
    %cst_19 = arith.constant dense<0.000000e+00> : vector<2xf32>
    %48 = vector.multi_reduction <add>, %47, %cst_19 [1] : vector<2x16xf32> to vector<2xf32>
    %49 = vector.shape_cast %48 : vector<2xf32> to vector<2x1xf32>
    %cst_20 = arith.constant 1.600000e+01 : f32
    %50 = vector.broadcast %cst_20 : f32 to vector<2x1xf32>
    %51 = arith.mulf %35, %50 : vector<2x1xf32>
    %52 = arith.divf %49, %51 : vector<2x1xf32>
    %53 = vector.extract_strided_slice %38 {offsets = [0, 32], sizes = [2, 16], strides = [1, 1]} : vector<2x73xf32> to vector<2x16xf32>
    %cst_21 = arith.constant dense<0.000000e+00> : vector<2xf32>
    %54 = vector.multi_reduction <add>, %53, %cst_21 [1] : vector<2x16xf32> to vector<2xf32>
    %55 = vector.shape_cast %54 : vector<2xf32> to vector<2x1xf32>
    %cst_22 = arith.constant 1.600000e+01 : f32
    %56 = vector.broadcast %cst_22 : f32 to vector<2x1xf32>
    %57 = arith.mulf %35, %56 : vector<2x1xf32>
    %58 = arith.divf %55, %57 : vector<2x1xf32>
    %59 = vector.extract_strided_slice %38 {offsets = [0, 48], sizes = [2, 16], strides = [1, 1]} : vector<2x73xf32> to vector<2x16xf32>
    %cst_23 = arith.constant dense<0.000000e+00> : vector<2xf32>
    %60 = vector.multi_reduction <add>, %59, %cst_23 [1] : vector<2x16xf32> to vector<2xf32>
    %61 = vector.shape_cast %60 : vector<2xf32> to vector<2x1xf32>
    %cst_24 = arith.constant 1.600000e+01 : f32
    %62 = vector.broadcast %cst_24 : f32 to vector<2x1xf32>
    %63 = arith.mulf %35, %62 : vector<2x1xf32>
    %64 = arith.divf %61, %63 : vector<2x1xf32>
    %65 = vector.extract_strided_slice %38 {offsets = [0, 65], sizes = [2, 8], strides = [1, 1]} : vector<2x73xf32> to vector<2x8xf32>
    %cst_25 = arith.constant dense<0.000000e+00> : vector<2xf32>
    %66 = vector.multi_reduction <add>, %65, %cst_25 [1] : vector<2x8xf32> to vector<2xf32>
    %67 = vector.shape_cast %66 : vector<2xf32> to vector<2x1xf32>
    %cst_26 = arith.constant 8.000000e+00 : f32
    %68 = vector.broadcast %cst_26 : f32 to vector<2x1xf32>
    %69 = arith.mulf %35, %68 : vector<2x1xf32>
    %70 = arith.divf %67, %69 : vector<2x1xf32>
    %cst_27 = arith.constant 3.200000e+01 : f32
    %71 = vector.broadcast %cst_27 : f32 to vector<2x1xf32>
    %72 = arith.divf %40, %71 : vector<2x1xf32>
    %73 = tpu.iota {dimensions = array<i32: 1>} : vector<2x128xi32>
    %c0_i32 = arith.constant 0 : i32
    %74 = vector.broadcast %c0_i32 : i32 to vector<2x128xi32>
    %75 = arith.cmpi eq, %73, %74 : vector<2x128xi32>
    %cst_28 = arith.constant 0.000000e+00 : f32
    %76 = vector.shape_cast %46 : vector<2x1xf32> to vector<2x1xf32>
    %77 = vector.broadcast %76 : vector<2x1xf32> to vector<2x128xf32>
    %78 = vector.broadcast %cst_28 : f32 to vector<2x128xf32>
    %79 = arith.select %75, %77, %78 : vector<2x128xi1>, vector<2x128xf32>
    %c1_i32 = arith.constant 1 : i32
    %80 = vector.broadcast %c1_i32 : i32 to vector<2x128xi32>
    %81 = arith.cmpi eq, %73, %80 : vector<2x128xi32>
    %cst_29 = arith.constant 0.000000e+00 : f32
    %82 = vector.shape_cast %52 : vector<2x1xf32> to vector<2x1xf32>
    %83 = vector.broadcast %82 : vector<2x1xf32> to vector<2x128xf32>
    %84 = vector.broadcast %cst_29 : f32 to vector<2x128xf32>
    %85 = arith.select %81, %83, %84 : vector<2x128xi1>, vector<2x128xf32>
    %86 = arith.addf %79, %85 : vector<2x128xf32>
    %c2_i32 = arith.constant 2 : i32
    %87 = vector.broadcast %c2_i32 : i32 to vector<2x128xi32>
    %88 = arith.cmpi eq, %73, %87 : vector<2x128xi32>
    %cst_30 = arith.constant 0.000000e+00 : f32
    %89 = vector.shape_cast %58 : vector<2x1xf32> to vector<2x1xf32>
    %90 = vector.broadcast %89 : vector<2x1xf32> to vector<2x128xf32>
    %91 = vector.broadcast %cst_30 : f32 to vector<2x128xf32>
    %92 = arith.select %88, %90, %91 : vector<2x128xi1>, vector<2x128xf32>
    %93 = arith.addf %86, %92 : vector<2x128xf32>
    %c3_i32 = arith.constant 3 : i32
    %94 = vector.broadcast %c3_i32 : i32 to vector<2x128xi32>
    %95 = arith.cmpi eq, %73, %94 : vector<2x128xi32>
    %cst_31 = arith.constant 0.000000e+00 : f32
    %96 = vector.shape_cast %64 : vector<2x1xf32> to vector<2x1xf32>
    %97 = vector.broadcast %96 : vector<2x1xf32> to vector<2x128xf32>
    %98 = vector.broadcast %cst_31 : f32 to vector<2x128xf32>
    %99 = arith.select %95, %97, %98 : vector<2x128xi1>, vector<2x128xf32>
    %100 = arith.addf %93, %99 : vector<2x128xf32>
    %c4_i32 = arith.constant 4 : i32
    %101 = vector.broadcast %c4_i32 : i32 to vector<2x128xi32>
    %102 = arith.cmpi eq, %73, %101 : vector<2x128xi32>
    %cst_32 = arith.constant 0.000000e+00 : f32
    %103 = vector.shape_cast %72 : vector<2x1xf32> to vector<2x1xf32>
    %104 = vector.broadcast %103 : vector<2x1xf32> to vector<2x128xf32>
    %105 = vector.broadcast %cst_32 : f32 to vector<2x128xf32>
    %106 = arith.select %102, %104, %105 : vector<2x128xi1>, vector<2x128xf32>
    %107 = arith.addf %100, %106 : vector<2x128xf32>
    %c5_i32 = arith.constant 5 : i32
    %108 = vector.broadcast %c5_i32 : i32 to vector<2x128xi32>
    %109 = arith.cmpi eq, %73, %108 : vector<2x128xi32>
    %cst_33 = arith.constant 0.000000e+00 : f32
    %110 = vector.shape_cast %70 : vector<2x1xf32> to vector<2x1xf32>
    %111 = vector.broadcast %110 : vector<2x1xf32> to vector<2x128xf32>
    %112 = vector.broadcast %cst_33 : f32 to vector<2x128xf32>
    %113 = arith.select %109, %111, %112 : vector<2x128xi1>, vector<2x128xf32>
    %114 = arith.addf %107, %113 : vector<2x128xf32>
    %c0_34 = arith.constant 0 : index
    %c0_35 = arith.constant 0 : index
    %115 = vector.load %arg3[%c0_34, %c0_35] : memref<2x128xf32, #tpu.memory_space<vmem>>, vector<2x128xf32>
    tpu.vector_store %arg3[%c0_34, %c0_35], %114 {strides = array<i32>} : memref<2x128xf32, #tpu.memory_space<vmem>>, vector<2x128xf32>,
    return
  }
  func.func @transform_0(%arg0: i32) -> (i32, i32, i32) {
    %c0_i32 = arith.constant 0 : i32
    %c0_i32_0 = arith.constant 0 : i32
    %c0_i32_1 = arith.constant 0 : i32
    return %arg0, %c0_i32, %c0_i32_0 : i32, i32, i32
  }
  func.func @transform_1(%arg0: i32) -> (i32, i32, i32) {
    %c0_i32 = arith.constant 0 : i32
    %c0_i32_0 = arith.constant 0 : i32
    %c0_i32_1 = arith.constant 0 : i32
    return %arg0, %c0_i32, %c0_i32_0 : i32, i32, i32
  }
  func.func @transform_2(%arg0: i32) -> (i32, i32) {
    %c0_i32 = arith.constant 0 : i32
    %c0_i32_0 = arith.constant 0 : i32
    return %arg0, %c0_i32 : i32, i32
  }
}

</mosaic_0001>

<llo_original>
// kernel: experimental_loss.1
$region0: #{experimental_loss.1}
  #allocation0 [shape = 'u32[]', space=smem, size = 0x4, offset = 0x4, fixed_abs, tag = 'smem constant byte address 0x4 - core index']
  #allocation1 [shape = 'u32[72,128]{1,0:T(1,128)}', space=vmem, size = 0x9000, scoped, tag = 'internal scratch']
  %s0 = inlined_call_operand.hbm [shape: f32[2,32,73], index: 0, kind: input, shape index: {}]
  %s1 = inlined_call_operand.hbm [shape: f32[2,32,73], index: 1, kind: input, shape index: {}]
  %s2 = inlined_call_operand.vmem [shape: f32[2,128], index: 2, kind: output, shape index: {}]
  %s3 = sld [smem:[#allocation0]]
  $region26: #{experimental_loss.1} parent=0
    _
  %s5 = ssub.s32 1, %s3
  %s6 = scalar_select 0, %s5, %s3
  $region1: #{experimental_loss.1} parent=0
    #allocation2 [shape = 'u8[32768]{0}', space=vmem, size = 0x8000, scoped, tag = 'input window, operand 0, single buffered']
    #allocation3 [shape = 's32[1]{0}', space=sflag, size = 0x4, scoped, tag = 'scoped memory for experimental_loss.1']
    #allocation4 [shape = 'u8[32768]{0}', space=vmem, size = 0x8000, scoped, tag = 'input window, operand 1, single buffered']
    #allocation5 [shape = 's32[1]{0}', space=sflag, size = 0x4, scoped, tag = 'scoped memory for experimental_loss.1']
    %7 = vsyncpa [#allocation3], 0
    %8 = vsyncpa [#allocation5], 0
    // Predicated region
    $region2: #{experimental_loss.1} parent=1 // pred_check
      _
    $region3: #{experimental_loss.1} parent=1 // pred_check_branch
      %10 = sbr.rel (0) target = $region5
    $region4: #{experimental_loss.1} parent=1 // pred_region
      %12 = vsyncadd [#allocation3], 0
      %s13 = sshll.u32 %s0, 4
      %s14 = int_to_ptr.hbm [resolvable:$true] %s13
      %s15 = sshll.u32 [#allocation2], 4
      %s16 = int_to_ptr.vmem [resolvable:$true] %s15
      %21 = dma.hbm_to_vmem [thread:$0]  %s14, 1024, %s16, [#allocation3], 128, 128, 8
    $region5: #{experimental_loss.1} parent=1 // pred_fallthru
      _
    // Predicated region
    $region6: #{experimental_loss.1} parent=1 // pred_check
      _
    $region7: #{experimental_loss.1} parent=1 // pred_check_branch
      %23 = sbr.rel (0) target = $region9
    $region8: #{experimental_loss.1} parent=1 // pred_region
      %25 = vsyncadd [#allocation5], 0
      %s26 = sshll.u32 %s1, 4
      %s27 = int_to_ptr.hbm [resolvable:$true] %s26
      %s28 = sshll.u32 [#allocation4], 4
      %s29 = int_to_ptr.vmem [resolvable:$true] %s28
      %34 = dma.hbm_to_vmem [thread:$0]  %s27, 1024, %s29, [#allocation5], 128, 128, 8
    $region9: #{experimental_loss.1} parent=1 // pred_fallthru
      _
    // Predicated region
    $region10: #{experimental_loss.1} parent=1 // pred_check
      _
    $region11: #{experimental_loss.1} parent=1 // pred_check_branch
      %36 = sbr.rel (0) target = $region13
    $region12: #{experimental_loss.1} parent=1 // pred_region
      %38 = dma.done [#allocation3], 1024
    $region13: #{experimental_loss.1} parent=1 // pred_fallthru
      _
    // Predicated region
    $region14: #{experimental_loss.1} parent=1 // pred_check
      _
    $region15: #{experimental_loss.1} parent=1 // pred_check_branch
      %40 = sbr.rel (0) target = $region17
    $region16: #{experimental_loss.1} parent=1 // pred_region
      %42 = dma.done [#allocation5], 1024
    $region17: #{experimental_loss.1} parent=1 // pred_fallthru
      _
    %v43 = vld [vmem:[#allocation2] sm:$0xff]
    %v44 = vld [vmem:[#allocation2 + $0x8] sm:$0xff]
    %v45 = vld [vmem:[#allocation2 + $0x10] sm:$0xff]
    %v46 = vld [vmem:[#allocation2 + $0x18] sm:$0xff]
    %v47 = vld [vmem:[#allocation2 + $0x20] sm:$0xff]
    %v48 = vld [vmem:[#allocation2 + $0x28] sm:$0xff]
    %v49 = vld [vmem:[#allocation2 + $0x30] sm:$0xff]
    %v50 = vld [vmem:[#allocation2 + $0x38] sm:$0xff]
    %v51 = vld [vmem:[#allocation4] sm:$0xff]
    %v52 = vld [vmem:[#allocation4 + $0x8] sm:$0xff]
    %v53 = vld [vmem:[#allocation4 + $0x10] sm:$0xff]
    %v54 = vld [vmem:[#allocation4 + $0x18] sm:$0xff]
    %v55 = vld [vmem:[#allocation4 + $0x20] sm:$0xff]
    %v56 = vld [vmem:[#allocation4 + $0x28] sm:$0xff]
    %v57 = vld [vmem:[#allocation4 + $0x30] sm:$0xff]
    %v58 = vld [vmem:[#allocation4 + $0x38] sm:$0xff]
    %v59 = vlog2.pop %v43
    %v60 = vmul.f32 %v59, 0.6931472
    %v61 = vlog2.pop %v44
    %v62 = vmul.f32 %v61, 0.6931472
    %v63 = vlog2.pop %v45
    %v64 = vmul.f32 %v63, 0.6931472
    %v65 = vlog2.pop %v46
    %v66 = vmul.f32 %v65, 0.6931472
    %v67 = vlog2.pop %v47
    %v68 = vmul.f32 %v67, 0.6931472
    %v69 = vlog2.pop %v48
    %v70 = vmul.f32 %v69, 0.6931472
    %v71 = vlog2.pop %v49
    %v72 = vmul.f32 %v71, 0.6931472
    %v73 = vlog2.pop %v50
    %v74 = vmul.f32 %v73, 0.6931472
    %v75 = vmax.f32 %v60, -100.0
    %v76 = vmax.f32 %v62, -100.0
    %v77 = vmax.f32 %v64, -100.0
    %v78 = vmax.f32 %v66, -100.0
    %v79 = vmax.f32 %v68, -100.0
    %v80 = vmax.f32 %v70, -100.0
    %v81 = vmax.f32 %v72, -100.0
    %v82 = vmax.f32 %v74, -100.0
    %v83 = vsub.f32 1.0, %v43
    %v84 = vsub.f32 1.0, %v44
    %v85 = vsub.f32 1.0, %v45
    %v86 = vsub.f32 1.0, %v46
    %v87 = vsub.f32 1.0, %v47
    %v88 = vsub.f32 1.0, %v48
    %v89 = vsub.f32 1.0, %v49
    %v90 = vsub.f32 1.0, %v50
    %v91 = vlog2.pop %v83
    %v92 = vmul.f32 %v91, 0.6931472
    %v93 = vlog2.pop %v84
    %v94 = vmul.f32 %v93, 0.6931472
    %v95 = vlog2.pop %v85
    %v96 = vmul.f32 %v95, 0.6931472
    %v97 = vlog2.pop %v86
    %v98 = vmul.f32 %v97, 0.6931472
    %v99 = vlog2.pop %v87
    %v100 = vmul.f32 %v99, 0.6931472
    %v101 = vlog2.pop %v88
    %v102 = vmul.f32 %v101, 0.6931472
    %v103 = vlog2.pop %v89
    %v104 = vmul.f32 %v103, 0.6931472
    %v105 = vlog2.pop %v90
    %v106 = vmul.f32 %v105, 0.6931472
    %v107 = vmax.f32 %v92, -100.0
    %v108 = vmax.f32 %v94, -100.0
    %v109 = vmax.f32 %v96, -100.0
    %v110 = vmax.f32 %v98, -100.0
    %v111 = vmax.f32 %v100, -100.0
    %v112 = vmax.f32 %v102, -100.0
    %v113 = vmax.f32 %v104, -100.0
    %v114 = vmax.f32 %v106, -100.0
    %v115 = vmul.f32 %v51, %v75
    %v116 = vmul.f32 %v52, %v76
    %v117 = vmul.f32 %v53, %v77
    %v118 = vmul.f32 %v54, %v78
    %v119 = vmul.f32 %v55, %v79
    %v120 = vmul.f32 %v56, %v80
    %v121 = vmul.f32 %v57, %v81
    %v122 = vmul.f32 %v58, %v82
    %v123 = vsub.f32 1.0, %v51
    %v124 = vsub.f32 1.0, %v52
    %v125 = vsub.f32 1.0, %v53
    %v126 = vsub.f32 1.0, %v54
    %v127 = vsub.f32 1.0, %v55
    %v128 = vsub.f32 1.0, %v56
    %v129 = vsub.f32 1.0, %v57
    %v130 = vsub.f32 1.0, %v58
    %v131 = vmul.f32 %v123, %v107
    %v132 = vmul.f32 %v124, %v108
    %v133 = vmul.f32 %v125, %v109
    %v134 = vmul.f32 %v126, %v110
    %v135 = vmul.f32 %v127, %v111
    %v136 = vmul.f32 %v128, %v112
    %v137 = vmul.f32 %v129, %v113
    %v138 = vmul.f32 %v130, %v114
    %v139 = vadd.f32 %v115, %v131
    %v140 = vadd.f32 %v116, %v132
    %v141 = vadd.f32 %v117, %v133
    %v142 = vadd.f32 %v118, %v134
    %v143 = vadd.f32 %v119, %v135
    %v144 = vadd.f32 %v120, %v136
    %v145 = vadd.f32 %v121, %v137
    %v146 = vadd.f32 %v122, %v138
    %v147 = vsub.f32 0.0, %v139
    %v148 = vsub.f32 0.0, %v140
    %v149 = vsub.f32 0.0, %v141
    %v150 = vsub.f32 0.0, %v142
    %v151 = vsub.f32 0.0, %v143
    %v152 = vsub.f32 0.0, %v144
    %v153 = vsub.f32 0.0, %v145
    %v154 = vsub.f32 0.0, %v146
    %vm155 = vcmp.gt.f32.partialorder %v51, 0.0
    %vm156 = vcmp.gt.f32.partialorder %v52, 0.0
    %vm157 = vcmp.gt.f32.partialorder %v53, 0.0
    %vm158 = vcmp.gt.f32.partialorder %v54, 0.0
    %vm159 = vcmp.gt.f32.partialorder %v55, 0.0
    %vm160 = vcmp.gt.f32.partialorder %v56, 0.0
    %vm161 = vcmp.gt.f32.partialorder %v57, 0.0
    %vm162 = vcmp.gt.f32.partialorder %v58, 0.0
    %v163 = vsel %vm155, 1, 0
    %v164 = vsel %vm156, 1, 0
    %v165 = vsel %vm157, 1, 0
    %v166 = vsel %vm158, 1, 0
    %v167 = vsel %vm159, 1, 0
    %v168 = vsel %vm160, 1, 0
    %v169 = vsel %vm161, 1, 0
    %v170 = vsel %vm162, 1, 0
    %v171 = vcvt.s32.f32 %v163
    %v172 = vcvt.s32.f32 %v164
    %v173 = vcvt.s32.f32 %v165
    %v174 = vcvt.s32.f32 %v166
    %v175 = vcvt.s32.f32 %v167
    %v176 = vcvt.s32.f32 %v168
    %v177 = vcvt.s32.f32 %v169
    %v178 = vcvt.s32.f32 %v170
    %vm179 = vcmask 531968
    %v180 = vsel %vm179, %v171, 0.0
    %v181 = vsel %vm179, %v172, 0.0
    %v182 = vadd.f32 %v180, %v181
    %v183 = vsel %vm179, %v173, 0.0
    %v184 = vadd.f32 %v182, %v183
    %v185 = vsel %vm179, %v174, 0.0
    %v186 = vadd.f32 %v184, %v185
    %v187 = vrot.slane %v186, 4
    %v188 = vadd.f32 %v186, %v187
    %v189 = vrot.slane %v188, 2
    %v190 = vadd.f32 %v188, %v189
    %v191 = vrot.slane %v190, 1
    %v192 = vadd.f32 %v190, %v191
    %v193 = vsel %vm179, %v175, 0.0
    %v194 = vsel %vm179, %v176, 0.0
    %v195 = vadd.f32 %v193, %v194
    %v196 = vsel %vm179, %v177, 0.0
    %v197 = vadd.f32 %v195, %v196
    %v198 = vsel %vm179, %v178, 0.0
    %v199 = vadd.f32 %v197, %v198
    %v200 = vrot.slane %v199, 4
    %v201 = vadd.f32 %v199, %v200
    %v202 = vrot.slane %v201, 2
    %v203 = vadd.f32 %v201, %v202
    %v204 = vrot.slane %v203, 1
    %v205 = vadd.f32 %v203, %v204
    %vm206 = vcmp.gt.f32.partialorder %v192, 0.0
    %vm207 = vcmp.gt.f32.partialorder %v205, 0.0
    %v208 = vsel %vm206, 1.0, 0.0
    %v209 = vsel %vm207, 1.0, 0.0
    %vm210 = vcmp.eq.f32.partialorder %v51, %v208
    %vm211 = vcmp.eq.f32.partialorder %v52, %v208
    %vm212 = vcmp.eq.f32.partialorder %v53, %v208
    %vm213 = vcmp.eq.f32.partialorder %v54, %v208
    %vm214 = vcmp.eq.f32.partialorder %v55, %v209
    %vm215 = vcmp.eq.f32.partialorder %v56, %v209
    %vm216 = vcmp.eq.f32.partialorder %v57, %v209
    %vm217 = vcmp.eq.f32.partialorder %v58, %v209
    %v218 = vsel %vm210, 1, 0
    %v219 = vsel %vm211, 1, 0
    %v220 = vsel %vm212, 1, 0
    %v221 = vsel %vm213, 1, 0
    %v222 = vsel %vm214, 1, 0
    %v223 = vsel %vm215, 1, 0
    %v224 = vsel %vm216, 1, 0
    %v225 = vsel %vm217, 1, 0
    %v226 = vcvt.s32.f32 %v218
    %v227 = vcvt.s32.f32 %v219
    %v228 = vcvt.s32.f32 %v220
    %v229 = vcvt.s32.f32 %v221
    %v230 = vcvt.s32.f32 %v222
    %v231 = vcvt.s32.f32 %v223
    %v232 = vcvt.s32.f32 %v224
    %v233 = vcvt.s32.f32 %v225
    %242 = vset.pattern.permute.xlu0 64
    %243 = vperm.xlu0 %242, %v226
    %v244 = vpop.permute.xlu0 %243
    %245 = vset.pattern.permute.xlu0 64
    %246 = vperm.xlu0 %245, %v227
    %v247 = vpop.permute.xlu0 %246
    %248 = vset.pattern.permute.xlu0 64
    %249 = vperm.xlu0 %248, %v228
    %v250 = vpop.permute.xlu0 %249
    %251 = vset.pattern.permute.xlu0 64
    %252 = vperm.xlu0 %251, %v229
    %v253 = vpop.permute.xlu0 %252
    %254 = vset.pattern.permute.xlu0 64
    %255 = vperm.xlu0 %254, %v230
    %v256 = vpop.permute.xlu0 %255
    %257 = vset.pattern.permute.xlu0 64
    %258 = vperm.xlu0 %257, %v231
    %v259 = vpop.permute.xlu0 %258
    %260 = vset.pattern.permute.xlu0 64
    %261 = vperm.xlu0 %260, %v232
    %v262 = vpop.permute.xlu0 %261
    %263 = vset.pattern.permute.xlu0 64
    %264 = vperm.xlu0 %263, %v233
    %v265 = vpop.permute.xlu0 %264
    %v266 = vlaneseq
    %v267 = vand.u32 %v266, 127
    %v268 = vperm.slane %v244, %v267
    %v269 = vadd.s32 %v267, 4294967288
    %v270 = vperm.slane %v247, %v269
    %vm271 = vcmask 130112
    %v272 = vsel %vm271, %v270, %v268
    %v273 = vadd.s32 %v267, 4294967280
    %v274 = vperm.slane %v250, %v273
    %vm275 = vcmask 195712
    %v276 = vsel %vm275, %v274, %v272
    %v277 = vadd.s32 %v267, 4294967272
    %v278 = vperm.slane %v253, %v277
    %vm279 = vcmask 261312
    %v280 = vsel %vm279, %v278, %v276
    %v281 = vperm.slane %v256, %v267
    %v282 = vperm.slane %v259, %v269
    %v283 = vsel %vm271, %v282, %v281
    %v284 = vperm.slane %v262, %v273
    %v285 = vsel %vm275, %v284, %v283
    %v286 = vperm.slane %v265, %v277
    %v287 = vsel %vm279, %v286, %v285
    %vm288 = vcmask 1041409
    %v289 = vsel %vm288, %v287, %v280
    %vm291 = vcmask 254976
    %v292 = vsel %vm291, %v289, 0.0
    %293 = vadd.xlane.f32.xlu0 %v292
    %v294 = vpop.xlane.xlu0 %293
    %v303 = vmul.f32 %v147, %v244
    %v304 = vmul.f32 %v148, %v247
    %v305 = vmul.f32 %v149, %v250
    %v306 = vmul.f32 %v150, %v253
    %v307 = vmul.f32 %v151, %v256
    %v308 = vmul.f32 %v152, %v259
    %v309 = vmul.f32 %v153, %v262
    %v310 = vmul.f32 %v154, %v265
    %vm311 = vcmask 596992
    %v312 = vsel %vm311, %v303, 0.0
    %v313 = vsel %vm311, %v304, 0.0
    %v314 = vadd.f32 %v312, %v313
    %v315 = vsel %vm311, %v305, 0.0
    %v316 = vadd.f32 %v314, %v315
    %v317 = vsel %vm311, %v306, 0.0
    %v318 = vadd.f32 %v316, %v317
    %v319 = vrot.slane %v318, 4
    %v320 = vadd.f32 %v318, %v319
    %v321 = vrot.slane %v320, 2
    %v322 = vadd.f32 %v320, %v321
    %v323 = vrot.slane %v322, 1
    %v324 = vadd.f32 %v322, %v323
    %v325 = vsel %vm311, %v307, 0.0
    %v326 = vsel %vm311, %v308, 0.0
    %v327 = vadd.f32 %v325, %v326
    %v328 = vsel %vm311, %v309, 0.0
    %v329 = vadd.f32 %v327, %v328
    %v330 = vsel %vm311, %v310, 0.0
    %v331 = vadd.f32 %v329, %v330
    %v332 = vrot.slane %v331, 4
    %v333 = vadd.f32 %v331, %v332
    %v334 = vrot.slane %v333, 2
    %v335 = vadd.f32 %v333, %v334
    %v336 = vrot.slane %v335, 1
    %v337 = vadd.f32 %v335, %v336
    %v338 = vsel %vm179, %v147, 0.0
    %v339 = vsel %vm179, %v148, 0.0
    %v340 = vadd.f32 %v338, %v339
    %v341 = vsel %vm179, %v149, 0.0
    %v342 = vadd.f32 %v340, %v341
    %v343 = vsel %vm179, %v150, 0.0
    %v344 = vadd.f32 %v342, %v343
    %v345 = vrot.slane %v344, 4
    %v346 = vadd.f32 %v344, %v345
    %v347 = vrot.slane %v346, 2
    %v348 = vadd.f32 %v346, %v347
    %v349 = vrot.slane %v348, 1
    %v350 = vadd.f32 %v348, %v349
    %v351 = vsel %vm179, %v151, 0.0
    %v352 = vsel %vm179, %v152, 0.0
    %v353 = vadd.f32 %v351, %v352
    %v354 = vsel %vm179, %v153, 0.0
    %v355 = vadd.f32 %v353, %v354
    %v356 = vsel %vm179, %v154, 0.0
    %v357 = vadd.f32 %v355, %v356
    %v358 = vrot.slane %v357, 4
    %v359 = vadd.f32 %v357, %v358
    %v360 = vrot.slane %v359, 2
    %v361 = vadd.f32 %v359, %v360
    %v362 = vrot.slane %v361, 1
    %v363 = vadd.f32 %v361, %v362
    %v366 = vsel %vm288, %v337, %v324
    %vm368 = vcmask 123904
    %v369 = vsel %vm368, %v366, 0.0
    %370 = vadd.xlane.f32.xlu0 %v369
    %v371 = vpop.xlane.xlu0 %370
    %v372 = vmul.f32 %v294, 16.0
    %v373 = vrcp.pop %v372
    %v374 = vmul.f32 %v372, %v373
    %v375 = vsub.f32 1.0, %v374
    %v376 = vmul.f32 %v373, %v375
    %v377 = vadd.f32 %v373, %v376
    %vm378 = vweird.f32 %v372
    %vm379 = vweird.f32 %v373
    %vm380 = vmor %vm378, %vm379
    %v381 = vsel %vm380, %v373, %v377
    %v382 = vand.u32 2147483647, %v372
    %vm383 = vcmp.eq.f32.partialorder %v382, 8.507059e+37
    %v384 = vand.u32 %v372, 2147483648
    %v385 = vor.u32 1.1754944e-38, %v384
    %v386 = vsel %vm383, %v385, %v381
    %v387 = vmul.f32 %v371, %v386
    %388 = vrot.lane.b32.xlu0 %v366, 112
    %v389 = vpop.permute.xlu0 %388
    %v391 = vsel %vm368, %v389, 0.0
    %392 = vadd.xlane.f32.xlu0 %v391
    %v393 = vpop.xlane.xlu0 %392
    %v394 = vmul.f32 %v393, %v386
    %395 = vrot.lane.b32.xlu0 %v366, 96
    %v396 = vpop.permute.xlu0 %395
    %v398 = vsel %vm368, %v396, 0.0
    %399 = vadd.xlane.f32.xlu0 %v398
    %v400 = vpop.xlane.xlu0 %399
    %v401 = vmul.f32 %v400, %v386
    %402 = vrot.lane.b32.xlu0 %v366, 80
    %v403 = vpop.permute.xlu0 %402
    %v405 = vsel %vm368, %v403, 0.0
    %406 = vadd.xlane.f32.xlu0 %v405
    %v407 = vpop.xlane.xlu0 %406
    %v408 = vmul.f32 %v407, %v386
    %409 = vrot.lane.b32.xlu0 %v366, 63
    %v410 = vpop.permute.xlu0 %409
    %vm412 = vcmask 58368
    %v413 = vsel %vm412, %v410, 0.0
    %414 = vadd.xlane.f32.xlu0 %v413
    %v415 = vpop.xlane.xlu0 %414
    %v416 = vmul.f32 %v294, 8.0
    %v417 = vrcp.pop %v416
    %v418 = vmul.f32 %v416, %v417
    %v419 = vsub.f32 1.0, %v418
    %v420 = vmul.f32 %v417, %v419
    %v421 = vadd.f32 %v417, %v420
    %vm422 = vweird.f32 %v416
    %vm423 = vweird.f32 %v417
    %vm424 = vmor %vm422, %vm423
    %v425 = vsel %vm424, %v417, %v421
    %v426 = vand.u32 2147483647, %v416
    %vm427 = vcmp.eq.f32.partialorder %v426, 8.507059e+37
    %v428 = vand.u32 %v416, 2147483648
    %v429 = vor.u32 1.1754944e-38, %v428
    %v430 = vsel %vm427, %v429, %v425
    %v431 = vmul.f32 %v415, %v430
    %v432 = vrcp.pop 32.0
    %v433 = vmul.f32 32.0, %v432
    %v434 = vsub.f32 1.0, %v433
    %v435 = vmul.f32 %v432, %v434
    %v436 = vadd.f32 %v432, %v435
    %vm437 = vweird.f32 %v432
    %v438 = vsel %vm437, %v432, %v436
    %v439 = vmul.f32 %v350, %v438
    %v440 = vmul.f32 %v363, %v438
    %vm441 = vcmp.eq.s32.totalorder %v267, 0
    %v442 = vsel %vm441, %v387, 0.0
    %vm443 = vcmp.eq.s32.totalorder %v267, 1
    %v444 = vsel %vm443, %v394, 0.0
    %v445 = vadd.f32 %v442, %v444
    %vm446 = vcmp.eq.s32.totalorder %v267, 2
    %v447 = vsel %vm446, %v401, 0.0
    %v448 = vadd.f32 %v445, %v447
    %vm449 = vcmp.eq.s32.totalorder %v267, 3
    %v450 = vsel %vm449, %v408, 0.0
    %v451 = vadd.f32 %v448, %v450
    %vm452 = vcmp.eq.s32.totalorder %v267, 4
    %454 = vset.pattern.permute.xlu0 64
    %455 = vperm.xlu0 %454, %v439
    %v456 = vpop.permute.xlu0 %455
    %458 = vset.pattern.permute.xlu0 64
    %459 = vperm.xlu0 %458, %v440
    %v460 = vpop.permute.xlu0 %459
    %v461 = vsel %vm288, %v460, %v456
    %v463 = vsel %vm452, %v461, 0.0
    %v464 = vadd.f32 %v451, %v463
    %vm465 = vcmp.eq.s32.totalorder %v267, 5
    %v466 = vsel %vm465, %v431, 0.0
    %v467 = vadd.f32 %v464, %v466
    %468 = vst [vmem:[%s2] sm:$0x3] %v467
    // Predicated region
    $region18: #{experimental_loss.1} parent=1 // pred_check
      _
    $region19: #{experimental_loss.1} parent=1 // pred_check_branch
      %470 = sbr.rel (0) target = $region21
    $region20: #{experimental_loss.1} parent=1 // pred_region
      _
    $region21: #{experimental_loss.1} parent=1 // pred_fallthru
      _
    // Predicated region
    $region22: #{experimental_loss.1} parent=1 // pred_check
      _
    $region23: #{experimental_loss.1} parent=1 // pred_check_branch
      %472 = sbr.rel (0) target = $region25
    $region24: #{experimental_loss.1} parent=1 // pred_region
      _
    $region25: #{experimental_loss.1} parent=1 // pred_fallthru
      _
    %473 = vsyncpa [#allocation3], 1
    %474 = vsyncpa [#allocation5], 1

</llo_original>
